<compile_context>
chip_gen: v7x
topology: tpu7x:2x2x1
jax: 0.10.0
libtpu: 0.0.40
codegen_flags: <defaults>
</compile_context>

<pallas_src>
import functools

import jax
import jax.numpy as jnp
from jax.experimental import pallas as pl
from jax.experimental.pallas import tpu as pltpu

LANES = 128
SUBLANES = 8


def _equal_pixels_bce_kernel(pred_ref, lab_ref, out_ref, acc_ref, *,
                             lambd, factor, n_valid, tile_rows, tiles_per_split):
    s = pl.program_id(0)   # parallel split axis (one partial sum per split)
    j = pl.program_id(1)   # sequential row-tile axis within the split

    @pl.when(j == 0)
    def _init():
        acc_ref[...] = jnp.zeros_like(acc_ref)

    p = pred_ref[...].astype(jnp.float32)
    y = lab_ref[...].astype(jnp.float32)

    # BCELoss(reduction='none'): -(y*log(p) + (1-y)*log(1-p)), logs clamped at
    # -100 like PyTorch (also makes garbage/padded lanes finite).
    log_p = jnp.maximum(jnp.log(p), -100.0)
    log_1mp = jnp.maximum(jnp.log1p(-p), -100.0)
    bce = -(y * log_p + (1.0 - y) * log_1mp)

    # Hardshrink: bce >= 0, so |bce| > lambd  <=>  bce > lambd (any sign of lambd).
    shr = jnp.where(bce > lambd, bce, 0.0)
    contrib = jnp.tanh(shr * factor)

    # Mask the ragged tail / out-of-range boundary rows against the true
    # element count (static). int32 index math: valid for < 2^31 elements.
    tr = contrib.shape[0]
    row0 = (s * tiles_per_split + j) * tile_rows
    row_idx = row0 + jax.lax.broadcasted_iota(jnp.int32, (tr, LANES), 0)
    lane_idx = jax.lax.broadcasted_iota(jnp.int32, (tr, LANES), 1)
    contrib = jnp.where(row_idx * LANES + lane_idx < n_valid, contrib, 0.0)

    # Vreg-shaped accumulation: reduce sublane-groups with plain elementwise
    # adds; defer the cross-lane/sublane reduction to the wrapper.
    if tr % SUBLANES == 0:
        acc_ref[...] += contrib.reshape(tr // SUBLANES, SUBLANES, LANES).sum(axis=0)
    else:
        # Tiny-input fallback (tile smaller than 8 sublane-groups).
        acc_ref[0:1, :] += contrib.sum(axis=0, keepdims=True)

    @pl.when(j == pl.num_programs(1) - 1)
    def _finalize():
        out_ref[...] = acc_ref[...][None, :, :]


def equal_pixels_bce(raw_predictions, labels_tensor, lambd=0.1, factor=10.0,
                     tile_rows=2048, num_splits=2):
    """Pallas implementation of EqualPixelsBCE.forward. Returns a scalar f32."""
    assert raw_predictions.shape == labels_tensor.shape

    n = int(raw_predictions.size)           # static true element count
    p = jnp.ravel(raw_predictions)           # native dtype, free view
    y = jnp.ravel(labels_tensor)

    pad = (-n) % LANES
    if pad:
        # <128-element tail pad only when not lane-divisible; value is irrelevant
        # because the tail is masked inside the kernel.
        p = jnp.pad(p, (0, pad), constant_values=0.5)
        y = jnp.pad(y, (0, pad), constant_values=0.5)
    rows = (n + pad) // LANES
    p = p.reshape(rows, LANES)
    y = y.reshape(rows, LANES)

    # Tile sizing: sublane-aligned, capped at the row count (block == full dim
    # is always legal for small inputs).
    if rows <= tile_rows:
        tile_rows_eff = rows
    else:
        tile_rows_eff = max(SUBLANES, (tile_rows // SUBLANES) * SUBLANES)

    total_tiles = -(-rows // tile_rows_eff)
    n_splits = max(1, min(int(num_splits), total_tiles))
    tiles_per_split = -(-total_tiles // n_splits)

    kernel = functools.partial(
        _equal_pixels_bce_kernel,
        lambd=float(lambd), factor=float(factor), n_valid=n,
        tile_rows=tile_rows_eff, tiles_per_split=tiles_per_split)

    partials = pl.pallas_call(
        kernel,
        out_shape=jax.ShapeDtypeStruct((n_splits, SUBLANES, LANES), jnp.float32),
        grid_spec=pltpu.PrefetchScalarGridSpec(
            num_scalar_prefetch=0,
            grid=(n_splits, tiles_per_split),
            in_specs=[
                pl.BlockSpec((tile_rows_eff, LANES),
                             lambda s, j: (s * tiles_per_split + j, 0)),
                pl.BlockSpec((tile_rows_eff, LANES),
                             lambda s, j: (s * tiles_per_split + j, 0)),
            ],
            out_specs=pl.BlockSpec((1, SUBLANES, LANES), lambda s, j: (s, 0, 0)),
            scratch_shapes=[pltpu.VMEM((SUBLANES, LANES), jnp.float32)],
        ),
        compiler_params=pltpu.CompilerParams(
            dimension_semantics=("parallel", "arbitrary")),
    )(p, y)

    # Final cross-lane/sublane/per-core reduction + mean (tiny, done in XLA).
    return jnp.sum(partials) / jnp.float32(n)


def _reference(raw_predictions, labels_tensor, lambd=0.1, factor=10.0):
    p = raw_predictions.astype(jnp.float32)
    y = labels_tensor.astype(jnp.float32)
    log_p = jnp.maximum(jnp.log(p), -100.0)
    log_1mp = jnp.maximum(jnp.log1p(-p), -100.0)
    bce = -(y * log_p + (1.0 - y) * log_1mp)
    shr = jnp.where(jnp.abs(bce) > lambd, bce, 0.0)
    return jnp.mean(jnp.tanh(shr * factor))


if __name__ == "__main__":
    key = jax.random.PRNGKey(0)
    k1, k2, k3, k4 = jax.random.split(key, 4)

    # Test 1: small NCHW-shaped probability/label tensors (lane-divisible count).
    shape = (2, 4, 16, 16)
    preds = jax.random.uniform(k1, shape, dtype=jnp.float32, minval=0.01, maxval=0.99)
    labels = (jax.random.uniform(k2, shape) > 0.5).astype(jnp.float32)
    out = jax.block_until_ready(equal_pixels_bce(preds, labels, lambd=0.1, factor=10.0))
    ref = _reference(preds, labels, lambd=0.1, factor=10.0)
    assert jnp.allclose(out, ref, rtol=1e-5, atol=1e-5), (out, ref)

    # Test 2: ragged element count (exercises tail masking + small-tile path).
    shape2 = (3, 5, 7, 11)
    preds2 = jax.random.uniform(k3, shape2, dtype=jnp.float32, minval=0.01, maxval=0.99)
    labels2 = (jax.random.uniform(k4, shape2) > 0.5).astype(jnp.float32)
    out2 = jax.block_until_ready(equal_pixels_bce(preds2, labels2, lambd=0.1, factor=10.0))
    ref2 = _reference(preds2, labels2, lambd=0.1, factor=10.0)
    assert jnp.allclose(out2, ref2, rtol=1e-5, atol=1e-5), (out2, ref2)

    print("KERNEL_OK")
</pallas_src>

<mosaic_0001>
module attributes {stable_mosaic.version = 11 : i64} {
  func.func @_equal_pixels_bce_kernel(%arg0: i32, %arg1: i32, %arg2: memref<16x128xf32, #tpu.memory_space<vmem>>, %arg3: memref<16x128xf32, #tpu.memory_space<vmem>>, %arg4: memref<1x8x128xf32, #tpu.memory_space<vmem>>, %arg5: memref<8x128xf32, #tpu.memory_space<vmem>>) attributes {dimension_semantics = [#tpu.dimension_semantics<parallel>, #tpu.dimension_semantics<arbitrary>], iteration_bounds = array<i64: 1, 1>, scalar_prefetch = 0 : i64, scratch_operands = 1 : i64, tpu.core_type = #tpu.core_type<tc>, window_params = [{transform_indices = @transform_0, window_bounds = array<i64: 16, 128>}, {transform_indices = @transform_1, window_bounds = array<i64: 16, 128>}, {transform_indices = @transform_2, window_bounds = array<i64: 1, 8, 128>}]} {
    %c0_i32 = arith.constant 0 : i32
    %0 = arith.cmpi eq, %arg1, %c0_i32 : i32
    %1 = arith.extui %0 : i1 to i32
    %c0_i32_0 = arith.constant 0 : i32
    %2 = arith.cmpi ne, %1, %c0_i32_0 : i32
    scf.if %2 {
      %cst_19 = arith.constant 0.000000e+00 : f32
      %49 = vector.broadcast %cst_19 : f32 to vector<8x128xf32>
      %c0_20 = arith.constant 0 : index
      %c0_21 = arith.constant 0 : index
      %50 = vector.load %arg5[%c0_20, %c0_21] : memref<8x128xf32, #tpu.memory_space<vmem>>, vector<8x128xf32>
      tpu.vector_store %arg5[%c0_20, %c0_21], %49 {strides = array<i32>} : memref<8x128xf32, #tpu.memory_space<vmem>>, vector<8x128xf32>,
    } else {
    }
    %c0 = arith.constant 0 : index
    %c0_1 = arith.constant 0 : index
    %3 = vector.load %arg2[%c0, %c0_1] : memref<16x128xf32, #tpu.memory_space<vmem>>, vector<16x128xf32>
    %c0_2 = arith.constant 0 : index
    %c0_3 = arith.constant 0 : index
    %4 = vector.load %arg3[%c0_2, %c0_3] : memref<16x128xf32, #tpu.memory_space<vmem>>, vector<16x128xf32>
    %5 = math.log %3 : vector<16x128xf32>
    %cst = arith.constant -1.000000e+02 : f32
    %6 = vector.broadcast %cst : f32 to vector<16x128xf32>
    %7 = arith.maximumf %5, %6 : vector<16x128xf32>
    %cst_4 = arith.constant 0.000000e+00 : f32
    %8 = vector.broadcast %cst_4 : f32 to vector<16x128xf32>
    %9 = arith.subf %8, %3 : vector<16x128xf32>
    %10 = math.log1p %9 : vector<16x128xf32>
    %cst_5 = arith.constant -1.000000e+02 : f32
    %11 = vector.broadcast %cst_5 : f32 to vector<16x128xf32>
    %12 = arith.maximumf %10, %11 : vector<16x128xf32>
    %13 = arith.mulf %4, %7 : vector<16x128xf32>
    %cst_6 = arith.constant 1.000000e+00 : f32
    %14 = vector.broadcast %cst_6 : f32 to vector<16x128xf32>
    %15 = arith.subf %14, %4 : vector<16x128xf32>
    %16 = arith.mulf %15, %12 : vector<16x128xf32>
    %17 = arith.addf %13, %16 : vector<16x128xf32>
    %cst_7 = arith.constant 0.000000e+00 : f32
    %18 = vector.broadcast %cst_7 : f32 to vector<16x128xf32>
    %19 = arith.subf %18, %17 : vector<16x128xf32>
    %cst_8 = arith.constant 1.000000e-01 : f32
    %20 = vector.broadcast %cst_8 : f32 to vector<16x128xf32>
    %21 = arith.cmpf ogt, %19, %20 : vector<16x128xf32>
    %cst_9 = arith.constant 0.000000e+00 : f32
    %22 = vector.broadcast %cst_9 : f32 to vector<16x128xf32>
    %23 = arith.select %21, %19, %22 : vector<16x128xi1>, vector<16x128xf32>
    %cst_10 = arith.constant 1.000000e+01 : f32
    %24 = vector.broadcast %cst_10 : f32 to vector<16x128xf32>
    %25 = arith.mulf %23, %24 : vector<16x128xf32>
    %26 = math.tanh %25 : vector<16x128xf32>
    %c1_i32 = arith.constant 1 : i32
    %27 = arith.muli %arg0, %c1_i32 : i32
    %28 = arith.addi %27, %arg1 : i32
    %c16_i32 = arith.constant 16 : i32
    %29 = arith.muli %28, %c16_i32 : i32
    %30 = tpu.iota {dimensions = array<i32: 0>} : vector<16x128xi32>
    %31 = vector.broadcast %29 : i32 to vector<16x128xi32>
    %32 = arith.addi %31, %30 : vector<16x128xi32>
    %33 = tpu.iota {dimensions = array<i32: 1>} : vector<16x128xi32>
    %c128_i32 = arith.constant 128 : i32
    %34 = vector.broadcast %c128_i32 : i32 to vector<16x128xi32>
    %35 = arith.muli %32, %34 : vector<16x128xi32>
    %36 = arith.addi %35, %33 : vector<16x128xi32>
    %c2048_i32 = arith.constant 2048 : i32
    %37 = vector.broadcast %c2048_i32 : i32 to vector<16x128xi32>
    %38 = arith.cmpi slt, %36, %37 : vector<16x128xi32>
    %cst_11 = arith.constant 0.000000e+00 : f32
    %39 = vector.broadcast %cst_11 : f32 to vector<16x128xf32>
    %40 = arith.select %38, %26, %39 : vector<16x128xi1>, vector<16x128xf32>
    %c0_12 = arith.constant 0 : index
    %c0_13 = arith.constant 0 : index
    %41 = vector.load %arg5[%c0_12, %c0_13] : memref<8x128xf32, #tpu.memory_space<vmem>>, vector<8x128xf32>
    %42 = vector.shape_cast %40 : vector<16x128xf32> to vector<2x8x128xf32>
    %cst_14 = arith.constant dense<0.000000e+00> : vector<8x128xf32>
    %43 = vector.multi_reduction <add>, %42, %cst_14 [0] : vector<2x8x128xf32> to vector<8x128xf32>
    %44 = arith.addf %41, %43 : vector<8x128xf32>
    %c0_15 = arith.constant 0 : index
    %c0_16 = arith.constant 0 : index
    %45 = vector.load %arg5[%c0_15, %c0_16] : memref<8x128xf32, #tpu.memory_space<vmem>>, vector<8x128xf32>
    tpu.vector_store %arg5[%c0_15, %c0_16], %44 {strides = array<i32>} : memref<8x128xf32, #tpu.memory_space<vmem>>, vector<8x128xf32>,
    %c0_i32_17 = arith.constant 0 : i32
    %46 = arith.cmpi eq, %arg1, %c0_i32_17 : i32
    %47 = arith.extui %46 : i1 to i32
    %c0_i32_18 = arith.constant 0 : i32
    %48 = arith.cmpi ne, %47, %c0_i32_18 : i32
    scf.if %48 {
      %c0_19 = arith.constant 0 : index
      %c0_20 = arith.constant 0 : index
      %49 = vector.load %arg5[%c0_19, %c0_20] : memref<8x128xf32, #tpu.memory_space<vmem>>, vector<8x128xf32>
      %50 = vector.shape_cast %49 : vector<8x128xf32> to vector<1x8x128xf32>
      %c0_21 = arith.constant 0 : index
      %c0_22 = arith.constant 0 : index
      %c0_23 = arith.constant 0 : index
      %51 = vector.load %arg4[%c0_21, %c0_22, %c0_23] : memref<1x8x128xf32, #tpu.memory_space<vmem>>, vector<1x8x128xf32>
      tpu.vector_store %arg4[%c0_21, %c0_22, %c0_23], %50 {strides = array<i32>} : memref<1x8x128xf32, #tpu.memory_space<vmem>>, vector<1x8x128xf32>,
    } else {
    }
    return
  }
  func.func @transform_0(%arg0: i32, %arg1: i32) -> (i32, i32) {
    %c1_i32 = arith.constant 1 : i32
    %0 = arith.muli %arg0, %c1_i32 : i32
    %1 = arith.addi %0, %arg1 : i32
    %c0_i32 = arith.constant 0 : i32
    %c0_i32_0 = arith.constant 0 : i32
    return %1, %c0_i32 : i32, i32
  }
  func.func @transform_1(%arg0: i32, %arg1: i32) -> (i32, i32) {
    %c1_i32 = arith.constant 1 : i32
    %0 = arith.muli %arg0, %c1_i32 : i32
    %1 = arith.addi %0, %arg1 : i32
    %c0_i32 = arith.constant 0 : i32
    %c0_i32_0 = arith.constant 0 : i32
    return %1, %c0_i32 : i32, i32
  }
  func.func @transform_2(%arg0: i32, %arg1: i32) -> (i32, i32, i32) {
    %c0_i32 = arith.constant 0 : i32
    %c0_i32_0 = arith.constant 0 : i32
    %c0_i32_1 = arith.constant 0 : i32
    return %arg0, %c0_i32, %c0_i32_0 : i32, i32, i32
  }
}

</mosaic_0001>

<llo_original>
// kernel: tpu_custom_call.1
$region0: #{tpu_custom_call.1}
  #allocation0 [shape = 'u32[]', space=smem, size = 0x4, offset = 0x4, fixed_abs, tag = 'smem constant byte address 0x4 - core index']
  #allocation1 [shape = 'u32[144,128]{1,0:T(1,128)}', space=vmem, size = 0x12000, scoped, tag = 'internal scratch']
  #allocation2 [shape = 'f32[8,128]{1,0:T(8,128)}', space=vmem, size = 0x1000, scoped, tag = 'scratch operand']
  %s0 = inlined_call_operand.hbm [shape: f32[16,128], index: 0, kind: input, shape index: {}]
  %s1 = inlined_call_operand.hbm [shape: f32[16,128], index: 1, kind: input, shape index: {}]
  %s2 = inlined_call_operand.hbm [shape: f32[1,8,128], index: 2, kind: output, shape index: {}]
  %s3 = sld [smem:[#allocation0]]
  $region34: #{tpu_custom_call.1} parent=0
    _
  %s5 = ssub.s32 1, %s3
  %s6 = scalar_select 0, %s5, %s3
  $region1: #{tpu_custom_call.1} parent=0
    #allocation3 [shape = 'u8[8192]{0}', space=vmem, size = 0x2000, scoped, tag = 'input window, operand 0, single buffered']
    #allocation4 [shape = 's32[1]{0}', space=sflag, size = 0x4, scoped, tag = 'scoped memory for tpu_custom_call.1']
    #allocation5 [shape = 's32[1]{0}', space=sflag, size = 0x4, scoped, tag = 'scoped memory for tpu_custom_call.1']
    #allocation6 [shape = 'u8[8192]{0}', space=vmem, size = 0x2000, scoped, tag = 'input window, operand 1, single buffered']
    #allocation7 [shape = 's32[1]{0}', space=sflag, size = 0x4, scoped, tag = 'scoped memory for tpu_custom_call.1']
    #allocation8 [shape = 'u8[4096]{0}', space=vmem, size = 0x1000, scoped, tag = 'output window, operand 0, single buffered']
    %7 = vsyncpa [#allocation4], 0
    %8 = vsyncpa [#allocation7], 0
    %9 = vsyncpa [#allocation5], 0
    // Predicated region
    $region2: #{tpu_custom_call.1} parent=1 // pred_check
      _
    $region3: #{tpu_custom_call.1} parent=1 // pred_check_branch
      %11 = sbr.rel (0) target = $region5
    $region4: #{tpu_custom_call.1} parent=1 // pred_region
      %s12 = sadd.s32 0, 0
      %s13 = smul.u32 2, %s12
      %s15 = ssub.s32 256, 256
      %16 = vsyncadd [#allocation4], %s15
      %s17 = smul.addr %s13, 128
      %s18 = scalar_lea.hbm %s0, %s17
      %s19 = sshll.u32 [#allocation3], 4
      %s20 = int_to_ptr.vmem [resolvable:$true] %s19
      %25 = dma.hbm_to_vmem [thread:$0]  %s18, 256, %s20, [#allocation4], 128, 128, 8
    $region5: #{tpu_custom_call.1} parent=1 // pred_fallthru
      _
    // Predicated region
    $region6: #{tpu_custom_call.1} parent=1 // pred_check
      _
    $region7: #{tpu_custom_call.1} parent=1 // pred_check_branch
      %27 = sbr.rel (0) target = $region9
    $region8: #{tpu_custom_call.1} parent=1 // pred_region
      %s28 = sadd.s32 0, 0
      %s29 = smul.u32 2, %s28
      %s31 = ssub.s32 256, 256
      %32 = vsyncadd [#allocation7], %s31
      %s33 = smul.addr %s29, 128
      %s34 = scalar_lea.hbm %s1, %s33
      %s35 = sshll.u32 [#allocation6], 4
      %s36 = int_to_ptr.vmem [resolvable:$true] %s35
      %41 = dma.hbm_to_vmem [thread:$0]  %s34, 256, %s36, [#allocation7], 128, 128, 8
    $region9: #{tpu_custom_call.1} parent=1 // pred_fallthru
      _
    // Predicated region
    $region10: #{tpu_custom_call.1} parent=1 // pred_check
      _
    $region11: #{tpu_custom_call.1} parent=1 // pred_check_branch
      %43 = sbr.rel (0) target = $region13
    $region12: #{tpu_custom_call.1} parent=1 // pred_region
      %44 = dma.done [#allocation4], 256
    $region13: #{tpu_custom_call.1} parent=1 // pred_fallthru
      _
    // Predicated region
    $region14: #{tpu_custom_call.1} parent=1 // pred_check
      _
    $region15: #{tpu_custom_call.1} parent=1 // pred_check_branch
      %46 = sbr.rel (0) target = $region17
    $region16: #{tpu_custom_call.1} parent=1 // pred_region
      %47 = dma.done [#allocation7], 256
    $region17: #{tpu_custom_call.1} parent=1 // pred_fallthru
      _
    %s48 = sadd.s32 0, 0
    %s49 = smul.u32 2, %s48
    %s50 = sadd.s32 0, 0
    %s51 = smul.u32 2, %s50
    %p52 = scmp.eq.s32.totalorder 0, 0
    // Predicated region
    $region18: #{tpu_custom_call.1} parent=1 // pred_check
      %p53 = pneg %p52
    $region19: #{tpu_custom_call.1} parent=1 // pred_check_branch
      %55 = sbr.rel (%p53) target = $region21
    $region20: #{tpu_custom_call.1} parent=1 // pred_region
      %56 = vst [vmem:[#allocation2] sm:$0xff] 0.0
    $region21: #{tpu_custom_call.1} parent=1 // pred_fallthru
      _
    %v57 = vld [vmem:[#allocation3] sm:$0xff]
    %v58 = vld [vmem:[#allocation3 + $0x8] sm:$0xff]
    %v59 = vld [vmem:[#allocation6] sm:$0xff]
    %v60 = vld [vmem:[#allocation6 + $0x8] sm:$0xff]
    %v61 = vlog2.pop %v57
    %v62 = vmul.f32 %v61, 0.6931472
    %v63 = vlog2.pop %v58
    %v64 = vmul.f32 %v63, 0.6931472
    %v65 = vmax.f32 %v62, -100.0
    %v66 = vmax.f32 %v64, -100.0
    %v67 = vsub.f32 0.0, %v57
    %v68 = vsub.f32 0.0, %v58
    %v69 = vadd.f32 %v67, 1.0
    %v70 = vlog2.pop %v69
    %v71 = vmul.f32 %v70, 0.6931472
    %v72 = vmul.f32 -0.5, %v67
    %v73 = vadd.f32 %v72, 1.0
    %v74 = vmul.f32 %v73, %v67
    %v75 = vand.u32 2147483647, %v67
    %vm76 = vcmp.lt.f32.partialorder %v75, 0.0004427343
    %v77 = vsel %vm76, %v74, %v71
    %v78 = vadd.f32 %v68, 1.0
    %v79 = vlog2.pop %v78
    %v80 = vmul.f32 %v79, 0.6931472
    %v81 = vmul.f32 -0.5, %v68
    %v82 = vadd.f32 %v81, 1.0
    %v83 = vmul.f32 %v82, %v68
    %v84 = vand.u32 2147483647, %v68
    %vm85 = vcmp.lt.f32.partialorder %v84, 0.0004427343
    %v86 = vsel %vm85, %v83, %v80
    %v87 = vmax.f32 %v77, -100.0
    %v88 = vmax.f32 %v86, -100.0
    %v89 = vmul.f32 %v59, %v65
    %v90 = vmul.f32 %v60, %v66
    %v91 = vsub.f32 1.0, %v59
    %v92 = vsub.f32 1.0, %v60
    %v93 = vmul.f32 %v91, %v87
    %v94 = vmul.f32 %v92, %v88
    %v95 = vadd.f32 %v89, %v93
    %v96 = vadd.f32 %v90, %v94
    %v97 = vsub.f32 0.0, %v95
    %v98 = vsub.f32 0.0, %v96
    %vm99 = vcmp.gt.f32.partialorder %v97, 0.1
    %vm100 = vcmp.gt.f32.partialorder %v98, 0.1
    %v101 = vsel %vm99, %v97, 0.0
    %v102 = vsel %vm100, %v98, 0.0
    %v103 = vmul.f32 %v101, 10.0
    %v104 = vmul.f32 %v102, 10.0
    %v105 = vtanh.pop %v103
    %v106 = vtanh.pop %v104
    %s107 = sadd.s32 0, 0
    %s108 = smul.u32 %s107, 16
    %v109 = vlaneseq
    %v110 = vshrl.u32 %v109, 7
    %v111 = vadd.s32 %v110, 8
    %v112 = vstv %s108
    %v113 = vadd.s32 %v112, %v110
    %v114 = vadd.s32 %v112, %v111
    %v115 = vlaneseq
    %v116 = vand.u32 %v115, 127
    %v117 = vmul.u32 %v113, 128
    %v118 = vmul.u32 %v114, 128
    %v119 = vadd.s32 %v117, %v116
    %v120 = vadd.s32 %v118, %v116
    %vm121 = vcmp.lt.s32.totalorder %v119, 2048
    %vm122 = vcmp.lt.s32.totalorder %v120, 2048
    %v123 = vsel %vm121, %v105, 0.0
    %v124 = vsel %vm122, %v106, 0.0
    %v125 = vld [vmem:[#allocation2] sm:$0xff]
    %v126 = vadd.f32 %v123, %v124
    %v127 = vadd.f32 %v125, %v126
    %128 = vst [vmem:[#allocation2] sm:$0xff] %v127
    // Predicated region
    $region22: #{tpu_custom_call.1} parent=1 // pred_check
      %p129 = pneg %p52
    $region23: #{tpu_custom_call.1} parent=1 // pred_check_branch
      %131 = sbr.rel (%p129) target = $region25
    $region24: #{tpu_custom_call.1} parent=1 // pred_region
      %v132 = vld [vmem:[#allocation2] sm:$0xff]
      %133 = vst [vmem:[#allocation8] sm:$0xff] %v132
    $region25: #{tpu_custom_call.1} parent=1 // pred_fallthru
      _
    // Predicated region
    $region26: #{tpu_custom_call.1} parent=1 // pred_check
      _
    $region27: #{tpu_custom_call.1} parent=1 // pred_check_branch
      %135 = sbr.rel (0) target = $region29
    $region28: #{tpu_custom_call.1} parent=1 // pred_region
      %s137 = ssub.s32 128, 128
      %138 = vsyncadd [#allocation5], %s137
      %s140 = sshll.u32 [#allocation8], 4
      %s141 = int_to_ptr.vmem [resolvable:$true] %s140
      %143 = dma.vmem_to_hbm [thread:$0]  %s141, 128, %s2, [#allocation5]
    $region29: #{tpu_custom_call.1} parent=1 // pred_fallthru
      _
    // Predicated region
    $region30: #{tpu_custom_call.1} parent=1 // pred_check
      _
    $region31: #{tpu_custom_call.1} parent=1 // pred_check_branch
      %145 = sbr.rel (0) target = $region33
    $region32: #{tpu_custom_call.1} parent=1 // pred_region
      %146 = dma.done [#allocation5], 128
    $region33: #{tpu_custom_call.1} parent=1 // pred_fallthru
      _
    %147 = vsyncpa [#allocation4], 1
    %148 = vsyncpa [#allocation7], 1
    %149 = vsyncpa [#allocation5], 1

</llo_original>
